<compile_context>
chip_gen: v7x
topology: tpu7x:2x2x1
jax: 0.10.0
libtpu: 0.0.40
codegen_flags: <defaults>
</compile_context>

<pallas_src>
import functools

import jax
import jax.numpy as jnp
from jax.experimental import pallas as pl
from jax.experimental.pallas import tpu as pltpu

LANE = 128  # TPU lane width.


def _round_up(n, m):
    return ((n + m - 1) // m) * m


def _mlp_kernel(x_ref, w1_ref, b1_ref, w2_ref, b2_ref, w3_ref, b3_ref, o_ref):
    tb = x_ref.shape[0]
    in_dim = x_ref.shape[1]
    hidden = w1_ref.shape[1]

    # ---- Layer 1 (in_dim -> hidden) on the VPU, exact f32 -------------------
    # K = 5 is far below MXU granularity; 5 unrolled broadcast-FMAs over the
    # (tb, hidden) tile are cheap VPU work and avoid a wasted MXU pass.
    x = x_ref[...]                                   # (tb, in_dim)  f32
    w1 = w1_ref[...]                                 # (in_dim, hid) f32
    h1 = jnp.broadcast_to(b1_ref[...], (tb, hidden))  # hoisted broadcast
    for k in range(in_dim):                          # unrolled at trace time
        h1 = h1 + x[:, k:k + 1] * w1[k:k + 1, :]
    h1 = jnp.maximum(h1, 0.0).astype(jnp.bfloat16)

    # ---- Layer 2 (hidden -> hidden) on the MXU ------------------------------
    h2 = jnp.dot(h1, w2_ref[...], preferred_element_type=jnp.float32) + b2_ref[...]
    h2 = jnp.maximum(h2, 0.0).astype(jnp.bfloat16)

    # ---- Layer 3 (hidden -> out) on the MXU (weight lane-padded to 128) -----
    out = jnp.dot(h2, w3_ref[...], preferred_element_type=jnp.float32) + b3_ref[...]
    o_ref[...] = out[:, : o_ref.shape[1]].astype(o_ref.dtype)


@functools.partial(jax.jit, static_argnames=("tile_b",))
def forward_dynamics_network(x, params, *, tile_b=512):
    """x: (B, input) float32; params: dict of w1,b1,w2,b2,w3,b3 (unpadded)."""
    w1 = params["w1"].astype(jnp.float32)                    # (in, hid) - VPU layer
    b1 = params["b1"].reshape(1, -1).astype(jnp.float32)
    w2 = params["w2"].astype(jnp.bfloat16)                   # (hid, hid) - MXU
    b2 = params["b2"].reshape(1, -1).astype(jnp.float32)
    w3 = params["w3"].astype(jnp.bfloat16)                   # (hid, out) - MXU
    b3 = params["b3"].reshape(1, -1).astype(jnp.float32)

    B, _ = x.shape
    out_dim = w3.shape[1]

    # Lane-pad only the (tiny) layer-3 weight/bias so its matmul is
    # lane-aligned; the kernel slices the real columns back before storing.
    n_pad = _round_up(out_dim, LANE)                          # 4 -> 128
    w3p = jnp.pad(w3, ((0, 0), (0, n_pad - out_dim)))
    b3p = jnp.pad(b3, ((0, 0), (0, n_pad - out_dim)))

    # Batch tiling: a single block equal to the full batch needs no alignment;
    # otherwise use an 8-aligned tile and pad the batch up to a multiple.
    if B <= tile_b:
        tb, b_pad = B, B
    else:
        tb = max(8, (tile_b // 8) * 8)
        b_pad = _round_up(B, tb)
    xp = x if b_pad == B else jnp.pad(x, ((0, b_pad - B), (0, 0)))
    grid = (b_pad // tb,)

    # Weights / biases: constant index_map -> DMA'd once, VMEM-resident.
    const = lambda a: pl.BlockSpec(a.shape, lambda i: (0, 0))

    out = pl.pallas_call(
        _mlp_kernel,
        out_shape=jax.ShapeDtypeStruct((b_pad, out_dim), jnp.float32),
        grid=grid,
        in_specs=[
            pl.BlockSpec((tb, x.shape[1]), lambda i: (i, 0)),  # x tiled over batch
            const(w1), const(b1),
            const(w2), const(b2),
            const(w3p), const(b3p),
        ],
        out_specs=pl.BlockSpec((tb, out_dim), lambda i: (i, 0)),
        compiler_params=pltpu.CompilerParams(
            dimension_semantics=("parallel",),  # megacore sharding on v7x
        ),
    )(xp, w1, b1, w2, b2, w3p, b3p)

    return out if b_pad == B else out[:B]


def init_params(key, input_dim=5, hidden=64, output=4):
    """Deterministic init mimicking nn.Linear default (U(-1/sqrt(fan_in), +))."""
    keys = jax.random.split(key, 6)

    def linear(kw, kb, fan_in, fan_out):
        bound = 1.0 / jnp.sqrt(fan_in)
        w = jax.random.uniform(kw, (fan_in, fan_out), jnp.float32, -bound, bound)
        b = jax.random.uniform(kb, (1, fan_out), jnp.float32, -bound, bound)
        return w, b

    w1, b1 = linear(keys[0], keys[1], input_dim, hidden)
    w2, b2 = linear(keys[2], keys[3], hidden, hidden)
    w3, b3 = linear(keys[4], keys[5], hidden, output)
    return {"w1": w1, "b1": b1, "w2": w2, "b2": b2, "w3": w3, "b3": b3}


def _reference_f32(x, p):
    h1 = jnp.maximum(x @ p["w1"] + p["b1"], 0.0)
    h2 = jnp.maximum(h1 @ p["w2"] + p["b2"], 0.0)
    return h2 @ p["w3"] + p["b3"]


def _reference_mixed(x, p):
    """Same math as the kernel: f32 layer 1, bf16-operand / f32-acc layers 2-3."""
    h1 = jnp.maximum(
        jnp.dot(x, p["w1"], precision=jax.lax.Precision.HIGHEST) + p["b1"], 0.0
    ).astype(jnp.bfloat16)
    h2 = jnp.maximum(
        jnp.dot(h1, p["w2"].astype(jnp.bfloat16),
                preferred_element_type=jnp.float32) + p["b2"], 0.0
    ).astype(jnp.bfloat16)
    return jnp.dot(h2, p["w3"].astype(jnp.bfloat16),
                   preferred_element_type=jnp.float32) + p["b3"]


if __name__ == "__main__":
    key = jax.random.PRNGKey(0)
    k_params, k_x, k_x2 = jax.random.split(key, 3)

    INPUT, HIDDEN, OUTPUT, BATCH = 5, 64, 4, 8
    params = init_params(k_params, INPUT, HIDDEN, OUTPUT)
    x = jax.random.normal(k_x, (BATCH, INPUT), jnp.float32)

    out = jax.block_until_ready(forward_dynamics_network(x, params))
    assert out.shape == (BATCH, OUTPUT)

    # Match the same-precision (mixed f32 / bf16-MXU) reference ...
    ref_mixed = _reference_mixed(x, params)
    assert jnp.allclose(out, ref_mixed, atol=2e-3, rtol=2e-3), (
        float(jnp.max(jnp.abs(out - ref_mixed))))
    # ... and stay close to the original f32 module semantics.
    ref_f32 = _reference_f32(x, params)
    assert jnp.allclose(out, ref_f32, atol=5e-2, rtol=5e-2), (
        float(jnp.max(jnp.abs(out - ref_f32))))

    # Exercise the multi-tile grid path (B > tile, B not a tile multiple).
    x2 = jax.random.normal(k_x2, (70, INPUT), jnp.float32)
    out2 = jax.block_until_ready(forward_dynamics_network(x2, params, tile_b=32))
    assert out2.shape == (70, OUTPUT)
    ref2 = _reference_mixed(x2, params)
    assert jnp.allclose(out2, ref2, atol=2e-3, rtol=2e-3), (
        float(jnp.max(jnp.abs(out2 - ref2))))

    print("KERNEL_OK")
</pallas_src>

<mosaic_0001>
module attributes {stable_mosaic.version = 11 : i64} {
  func.func @_mlp_kernel(%arg0: i32, %arg1: memref<8x5xf32, #tpu.memory_space<vmem>>, %arg2: memref<5x64xf32, #tpu.memory_space<vmem>>, %arg3: memref<1x64xf32, #tpu.memory_space<vmem>>, %arg4: memref<64x64xbf16, #tpu.memory_space<vmem>>, %arg5: memref<1x64xf32, #tpu.memory_space<vmem>>, %arg6: memref<64x128xbf16, #tpu.memory_space<vmem>>, %arg7: memref<1x128xf32, #tpu.memory_space<vmem>>, %arg8: memref<8x4xf32, #tpu.memory_space<vmem>>) attributes {dimension_semantics = [#tpu.dimension_semantics<parallel>], iteration_bounds = array<i64: 1>, scalar_prefetch = 0 : i64, scratch_operands = 0 : i64, tpu.core_type = #tpu.core_type<tc>, window_params = [{transform_indices = @transform_0, window_bounds = array<i64: 8, 5>}, {pipeline_mode = #tpu.pipeline_mode<synchronous>, transform_indices = @transform_1, window_bounds = array<i64: 5, 64>}, {pipeline_mode = #tpu.pipeline_mode<synchronous>, transform_indices = @transform_2, window_bounds = array<i64: 1, 64>}, {pipeline_mode = #tpu.pipeline_mode<synchronous>, transform_indices = @transform_3, window_bounds = array<i64: 64, 64>}, {pipeline_mode = #tpu.pipeline_mode<synchronous>, transform_indices = @transform_4, window_bounds = array<i64: 1, 64>}, {pipeline_mode = #tpu.pipeline_mode<synchronous>, transform_indices = @transform_5, window_bounds = array<i64: 64, 128>}, {pipeline_mode = #tpu.pipeline_mode<synchronous>, transform_indices = @transform_6, window_bounds = array<i64: 1, 128>}, {transform_indices = @transform_7, window_bounds = array<i64: 8, 4>}]} {
    %c0 = arith.constant 0 : index
    %c0_0 = arith.constant 0 : index
    %0 = vector.load %arg1[%c0, %c0_0] : memref<8x5xf32, #tpu.memory_space<vmem>>, vector<8x5xf32>
    %c0_1 = arith.constant 0 : index
    %c0_2 = arith.constant 0 : index
    %1 = vector.load %arg2[%c0_1, %c0_2] : memref<5x64xf32, #tpu.memory_space<vmem>>, vector<5x64xf32>
    %c0_3 = arith.constant 0 : index
    %c0_4 = arith.constant 0 : index
    %2 = vector.load %arg3[%c0_3, %c0_4] : memref<1x64xf32, #tpu.memory_space<vmem>>, vector<1x64xf32>
    %3 = vector.shape_cast %2 : vector<1x64xf32> to vector<1x64xf32>
    %4 = vector.broadcast %3 : vector<1x64xf32> to vector<8x64xf32>
    %5 = vector.extract_strided_slice %0 {offsets = [0, 0], sizes = [8, 1], strides = [1, 1]} : vector<8x5xf32> to vector<8x1xf32>
    %6 = vector.extract_strided_slice %1 {offsets = [0, 0], sizes = [1, 64], strides = [1, 1]} : vector<5x64xf32> to vector<1x64xf32>
    %7 = vector.broadcast %5 : vector<8x1xf32> to vector<8x64xf32>
    %8 = vector.broadcast %6 : vector<1x64xf32> to vector<8x64xf32>
    %9 = arith.mulf %7, %8 : vector<8x64xf32>
    %10 = arith.addf %4, %9 : vector<8x64xf32>
    %11 = vector.extract_strided_slice %0 {offsets = [0, 1], sizes = [8, 1], strides = [1, 1]} : vector<8x5xf32> to vector<8x1xf32>
    %12 = vector.extract_strided_slice %1 {offsets = [1, 0], sizes = [1, 64], strides = [1, 1]} : vector<5x64xf32> to vector<1x64xf32>
    %13 = vector.broadcast %11 : vector<8x1xf32> to vector<8x64xf32>
    %14 = vector.broadcast %12 : vector<1x64xf32> to vector<8x64xf32>
    %15 = arith.mulf %13, %14 : vector<8x64xf32>
    %16 = arith.addf %10, %15 : vector<8x64xf32>
    %17 = vector.extract_strided_slice %0 {offsets = [0, 2], sizes = [8, 1], strides = [1, 1]} : vector<8x5xf32> to vector<8x1xf32>
    %18 = vector.extract_strided_slice %1 {offsets = [2, 0], sizes = [1, 64], strides = [1, 1]} : vector<5x64xf32> to vector<1x64xf32>
    %19 = vector.broadcast %17 : vector<8x1xf32> to vector<8x64xf32>
    %20 = vector.broadcast %18 : vector<1x64xf32> to vector<8x64xf32>
    %21 = arith.mulf %19, %20 : vector<8x64xf32>
    %22 = arith.addf %16, %21 : vector<8x64xf32>
    %23 = vector.extract_strided_slice %0 {offsets = [0, 3], sizes = [8, 1], strides = [1, 1]} : vector<8x5xf32> to vector<8x1xf32>
    %24 = vector.extract_strided_slice %1 {offsets = [3, 0], sizes = [1, 64], strides = [1, 1]} : vector<5x64xf32> to vector<1x64xf32>
    %25 = vector.broadcast %23 : vector<8x1xf32> to vector<8x64xf32>
    %26 = vector.broadcast %24 : vector<1x64xf32> to vector<8x64xf32>
    %27 = arith.mulf %25, %26 : vector<8x64xf32>
    %28 = arith.addf %22, %27 : vector<8x64xf32>
    %29 = vector.extract_strided_slice %0 {offsets = [0, 4], sizes = [8, 1], strides = [1, 1]} : vector<8x5xf32> to vector<8x1xf32>
    %30 = vector.extract_strided_slice %1 {offsets = [4, 0], sizes = [1, 64], strides = [1, 1]} : vector<5x64xf32> to vector<1x64xf32>
    %31 = vector.broadcast %29 : vector<8x1xf32> to vector<8x64xf32>
    %32 = vector.broadcast %30 : vector<1x64xf32> to vector<8x64xf32>
    %33 = arith.mulf %31, %32 : vector<8x64xf32>
    %34 = arith.addf %28, %33 : vector<8x64xf32>
    %cst = arith.constant 0.000000e+00 : f32
    %35 = vector.broadcast %cst : f32 to vector<8x64xf32>
    %36 = arith.maximumf %34, %35 : vector<8x64xf32>
    %37 = arith.truncf %36 : vector<8x64xf32> to vector<8x64xbf16>
    %c0_5 = arith.constant 0 : index
    %c0_6 = arith.constant 0 : index
    %38 = vector.load %arg4[%c0_5, %c0_6] : memref<64x64xbf16, #tpu.memory_space<vmem>>, vector<64x64xbf16>
    %cst_7 = arith.constant dense<0.000000e+00> : vector<8x64xf32>
    %39 = tpu.matmul %37, %38, %cst_7 {dimension_numbers = #tpu.dot_dimension_numbers<[1], [0], [0], [1], [0, 0, 1, 1], [], []>} : vector<8x64xbf16>, vector<64x64xbf16>, vector<8x64xf32> -> vector<8x64xf32>
    %c0_8 = arith.constant 0 : index
    %c0_9 = arith.constant 0 : index
    %40 = vector.load %arg5[%c0_8, %c0_9] : memref<1x64xf32, #tpu.memory_space<vmem>>, vector<1x64xf32>
    %41 = vector.broadcast %40 : vector<1x64xf32> to vector<8x64xf32>
    %42 = arith.addf %39, %41 : vector<8x64xf32>
    %cst_10 = arith.constant 0.000000e+00 : f32
    %43 = vector.broadcast %cst_10 : f32 to vector<8x64xf32>
    %44 = arith.maximumf %42, %43 : vector<8x64xf32>
    %45 = arith.truncf %44 : vector<8x64xf32> to vector<8x64xbf16>
    %c0_11 = arith.constant 0 : index
    %c0_12 = arith.constant 0 : index
    %46 = vector.load %arg6[%c0_11, %c0_12] : memref<64x128xbf16, #tpu.memory_space<vmem>>, vector<64x128xbf16>
    %cst_13 = arith.constant dense<0.000000e+00> : vector<8x128xf32>
    %47 = tpu.matmul %45, %46, %cst_13 {dimension_numbers = #tpu.dot_dimension_numbers<[1], [0], [0], [1], [0, 0, 1, 1], [], []>} : vector<8x64xbf16>, vector<64x128xbf16>, vector<8x128xf32> -> vector<8x128xf32>
    %c0_14 = arith.constant 0 : index
    %c0_15 = arith.constant 0 : index
    %48 = vector.load %arg7[%c0_14, %c0_15] : memref<1x128xf32, #tpu.memory_space<vmem>>, vector<1x128xf32>
    %49 = vector.broadcast %48 : vector<1x128xf32> to vector<8x128xf32>
    %50 = arith.addf %47, %49 : vector<8x128xf32>
    %51 = vector.extract_strided_slice %50 {offsets = [0, 0], sizes = [8, 4], strides = [1, 1]} : vector<8x128xf32> to vector<8x4xf32>
    %c0_16 = arith.constant 0 : index
    %c0_17 = arith.constant 0 : index
    %52 = vector.load %arg8[%c0_16, %c0_17] : memref<8x4xf32, #tpu.memory_space<vmem>>, vector<8x4xf32>
    tpu.vector_store %arg8[%c0_16, %c0_17], %51 {strides = array<i32>} : memref<8x4xf32, #tpu.memory_space<vmem>>, vector<8x4xf32>,
    return
  }
  func.func @transform_0(%arg0: i32) -> (i32, i32) {
    %c0_i32 = arith.constant 0 : i32
    %c0_i32_0 = arith.constant 0 : i32
    return %arg0, %c0_i32 : i32, i32
  }
  func.func @transform_1(%arg0: i32) -> (i32, i32) {
    %c0_i32 = arith.constant 0 : i32
    %c0_i32_0 = arith.constant 0 : i32
    %c0_i32_1 = arith.constant 0 : i32
    return %c0_i32, %c0_i32_0 : i32, i32
  }
  func.func @transform_2(%arg0: i32) -> (i32, i32) {
    %c0_i32 = arith.constant 0 : i32
    %c0_i32_0 = arith.constant 0 : i32
    %c0_i32_1 = arith.constant 0 : i32
    return %c0_i32, %c0_i32_0 : i32, i32
  }
  func.func @transform_3(%arg0: i32) -> (i32, i32) {
    %c0_i32 = arith.constant 0 : i32
    %c0_i32_0 = arith.constant 0 : i32
    %c0_i32_1 = arith.constant 0 : i32
    return %c0_i32, %c0_i32_0 : i32, i32
  }
  func.func @transform_4(%arg0: i32) -> (i32, i32) {
    %c0_i32 = arith.constant 0 : i32
    %c0_i32_0 = arith.constant 0 : i32
    %c0_i32_1 = arith.constant 0 : i32
    return %c0_i32, %c0_i32_0 : i32, i32
  }
  func.func @transform_5(%arg0: i32) -> (i32, i32) {
    %c0_i32 = arith.constant 0 : i32
    %c0_i32_0 = arith.constant 0 : i32
    %c0_i32_1 = arith.constant 0 : i32
    return %c0_i32, %c0_i32_0 : i32, i32
  }
  func.func @transform_6(%arg0: i32) -> (i32, i32) {
    %c0_i32 = arith.constant 0 : i32
    %c0_i32_0 = arith.constant 0 : i32
    %c0_i32_1 = arith.constant 0 : i32
    return %c0_i32, %c0_i32_0 : i32, i32
  }
  func.func @transform_7(%arg0: i32) -> (i32, i32) {
    %c0_i32 = arith.constant 0 : i32
    %c0_i32_0 = arith.constant 0 : i32
    return %arg0, %c0_i32 : i32, i32
  }
}

</mosaic_0001>

<llo_original>
// kernel: forward_dynamics_network.1
$region0: #{forward_dynamics_network.1}
  #allocation0 [shape = 'u32[]', space=smem, size = 0x4, offset = 0x4, fixed_abs, tag = 'smem constant byte address 0x4 - core index']
  #allocation1 [shape = 'u32[144,128]{1,0:T(1,128)}', space=vmem, size = 0x12000, scoped, tag = 'internal scratch']
  %s0 = inlined_call_operand.vmem [shape: f32[8,5], index: 0, kind: input, shape index: {}]
  %s1 = inlined_call_operand.vmem [shape: f32[5,64], index: 1, kind: input, shape index: {}]
  %s2 = inlined_call_operand.vmem [shape: f32[1,64], index: 2, kind: input, shape index: {}]
  %s3 = inlined_call_operand.vmem [shape: bf16[64,64], index: 3, kind: input, shape index: {}]
  %s4 = inlined_call_operand.vmem [shape: f32[1,64], index: 4, kind: input, shape index: {}]
  %s5 = inlined_call_operand.vmem [shape: bf16[64,128], index: 5, kind: input, shape index: {}]
  %s6 = inlined_call_operand.vmem [shape: f32[1,128], index: 6, kind: input, shape index: {}]
  %s7 = inlined_call_operand.vmem [shape: f32[8,4], index: 7, kind: output, shape index: {}]
  %s8 = sld [smem:[#allocation0]]
  $region38: #{forward_dynamics_network.1} parent=0
    _
  %s10 = ssub.s32 1, %s8
  %s11 = scalar_select 0, %s10, %s8
  // Predicated region
  $region2: #{forward_dynamics_network.1} parent=0 // pred_check
    _
  $region3: #{forward_dynamics_network.1} parent=0 // pred_check_branch
    %13 = sbr.rel (0) target = $region5
  $region4: #{forward_dynamics_network.1} parent=0 // pred_region
    _
  $region5: #{forward_dynamics_network.1} parent=0 // pred_fallthru
    _
  // Predicated region
  $region6: #{forward_dynamics_network.1} parent=0 // pred_check
    _
  $region7: #{forward_dynamics_network.1} parent=0 // pred_check_branch
    %15 = sbr.rel (0) target = $region9
  $region8: #{forward_dynamics_network.1} parent=0 // pred_region
    _
  $region9: #{forward_dynamics_network.1} parent=0 // pred_fallthru
    _
  // Predicated region
  $region10: #{forward_dynamics_network.1} parent=0 // pred_check
    _
  $region11: #{forward_dynamics_network.1} parent=0 // pred_check_branch
    %17 = sbr.rel (0) target = $region13
  $region12: #{forward_dynamics_network.1} parent=0 // pred_region
    _
  $region13: #{forward_dynamics_network.1} parent=0 // pred_fallthru
    _
  // Predicated region
  $region14: #{forward_dynamics_network.1} parent=0 // pred_check
    _
  $region15: #{forward_dynamics_network.1} parent=0 // pred_check_branch
    %19 = sbr.rel (0) target = $region17
  $region16: #{forward_dynamics_network.1} parent=0 // pred_region
    _
  $region17: #{forward_dynamics_network.1} parent=0 // pred_fallthru
    _
  // Predicated region
  $region18: #{forward_dynamics_network.1} parent=0 // pred_check
    _
  $region19: #{forward_dynamics_network.1} parent=0 // pred_check_branch
    %21 = sbr.rel (0) target = $region21
  $region20: #{forward_dynamics_network.1} parent=0 // pred_region
    _
  $region21: #{forward_dynamics_network.1} parent=0 // pred_fallthru
    _
  // Predicated region
  $region22: #{forward_dynamics_network.1} parent=0 // pred_check
    _
  $region23: #{forward_dynamics_network.1} parent=0 // pred_check_branch
    %23 = sbr.rel (0) target = $region25
  $region24: #{forward_dynamics_network.1} parent=0 // pred_region
    _
  $region25: #{forward_dynamics_network.1} parent=0 // pred_fallthru
    _
  // Predicated region
  $region26: #{forward_dynamics_network.1} parent=0 // pred_check
    _
  $region27: #{forward_dynamics_network.1} parent=0 // pred_check_branch
    %25 = sbr.rel (0) target = $region29
  $region28: #{forward_dynamics_network.1} parent=0 // pred_region
    _
  $region29: #{forward_dynamics_network.1} parent=0 // pred_fallthru
    _
  %v27 = vld [vmem:[%s0] sm:$0xff]
  %v28 = vld [vmem:[%s1] sm:$0x1f]
  %v29 = vld [vmem:[%s2] sm:$0x1]
  %v31 = vlaneseq
  %v32 = vshrl.u32 %v31, 7
  %v33 = vsub.s32 0, %v32
  %v34 = vrot.slane %v29, %v33
  %37 = vset.pattern.permute.xlu0 0
  %38 = vperm.xlu0 %37, %v27
  %v39 = vpop.permute.xlu0 %38
  %v41 = vlaneseq
  %v42 = vshrl.u32 %v41, 7
  %v43 = vsub.s32 0, %v42
  %v44 = vrot.slane %v28, %v43
  %v45 = vmul.f32 %v39, %v44
  %v46 = vadd.f32 %v34, %v45
  %47 = vset.pattern.permute.xlu0 1
  %48 = vperm.xlu0 %47, %v27
  %v49 = vpop.permute.xlu0 %48
  %v51 = vlaneseq
  %v52 = vshrl.u32 %v51, 7
  %v53 = vsub.s32 1, %v52
  %v54 = vrot.slane %v28, %v53
  %v55 = vmul.f32 %v49, %v54
  %v56 = vadd.f32 %v46, %v55
  %57 = vset.pattern.permute.xlu0 2
  %58 = vperm.xlu0 %57, %v27
  %v59 = vpop.permute.xlu0 %58
  %v61 = vlaneseq
  %v62 = vshrl.u32 %v61, 7
  %v63 = vsub.s32 2, %v62
  %v64 = vrot.slane %v28, %v63
  %v65 = vmul.f32 %v59, %v64
  %v66 = vadd.f32 %v56, %v65
  %67 = vset.pattern.permute.xlu0 3
  %68 = vperm.xlu0 %67, %v27
  %v69 = vpop.permute.xlu0 %68
  %v71 = vlaneseq
  %v72 = vshrl.u32 %v71, 7
  %v73 = vsub.s32 3, %v72
  %v74 = vrot.slane %v28, %v73
  %v75 = vmul.f32 %v69, %v74
  %v76 = vadd.f32 %v66, %v75
  %77 = vset.pattern.permute.xlu0 4
  %78 = vperm.xlu0 %77, %v27
  %v79 = vpop.permute.xlu0 %78
  %v81 = vlaneseq
  %v82 = vshrl.u32 %v81, 7
  %v83 = vsub.s32 4, %v82
  %v84 = vrot.slane %v28, %v83
  %v85 = vmul.f32 %v79, %v84
  %v86 = vadd.f32 %v76, %v85
  %v87 = vmax.f32 %v86, 0.0
  %v88 = vpack.c.bf16 %v87, %v87
  %v89 = vld [vmem:[%s3] sm:$0xf]
  %v90 = vld [vmem:[%s3 + $0x4] sm:$0xf]
  %v91 = vld [vmem:[%s3 + $0x8] sm:$0xf]
  %v92 = vld [vmem:[%s3 + $0xc] sm:$0xf]
  %v93 = vld [vmem:[%s3 + $0x10] sm:$0xf]
  %v94 = vld [vmem:[%s3 + $0x14] sm:$0xf]
  %v95 = vld [vmem:[%s3 + $0x18] sm:$0xf]
  %v96 = vld [vmem:[%s3 + $0x1c] sm:$0xf]
  %v97 = vld [vmem:[%s4] sm:$0x1]
  %v99 = vlaneseq
  %v100 = vshrl.u32 %v99, 7
  %v101 = vsub.s32 0, %v100
  %v102 = vrot.slane %v97, %v101
  %v112 = vunpack.c.l.b16 %v89
  %v113 = vunpack.c.l.b16 %v90
  %v114 = vunpack.c.l.b16 %v91
  %v115 = vunpack.c.l.b16 %v92
  %v116 = vunpack.c.l.b16 %v93
  %v117 = vunpack.c.l.b16 %v94
  %v118 = vunpack.c.l.b16 %v95
  %v119 = vunpack.c.l.b16 %v96
  %v120 = vpack.c.b16 %v113, %v112
  %v121 = vpack.c.b16 %v115, %v114
  %v122 = vpack.c.b16 %v117, %v116
  %v123 = vpack.c.b16 %v119, %v118
  %vm128 = vcmask 523264
  %v130 = vsel %vm128, %v88, 0
  %132 = vmatprep.subr.bf16.mxu0 0
  %133 = vmatpush1.bf16.msra.mxu0 %v120
  %134 = vmatprep.subr.bf16.mxu0 0
  %135 = vmatpush1.bf16.msra.mxu0 %v121
  %136 = vmatprep.subr.bf16.mxu0 0
  %137 = vmatpush1.bf16.msra.mxu0 %v122
  %138 = vmatprep.subr.bf16.mxu0 0
  %139 = vmatpush1.bf16.msra.mxu0 %v123
  %140 = vmatprep.subr.bf16.mxu0 0
  %141 = vmatpush1.bf16.msra.mxu0 0
  %142 = vmatprep.subr.bf16.mxu0 0
  %143 = vmatpush1.bf16.msra.mxu0 0
  %144 = vmatprep.subr.bf16.mxu0 0
  %145 = vmatpush1.bf16.msra.mxu0 0
  %146 = vmatprep.subr.bf16.mxu0 0
  %147 = vmatpush1.bf16.msra.mxu0 0
  %148 = vmatprep.subr.bf16.mxu0 0
  %149 = vmatpush1.bf16.msra.mxu0 0
  %150 = vmatprep.subr.bf16.mxu0 0
  %151 = vmatpush1.bf16.msra.mxu0 0
  %152 = vmatprep.subr.bf16.mxu0 0
  %153 = vmatpush1.bf16.msra.mxu0 0
  %154 = vmatprep.subr.bf16.mxu0 0
  %155 = vmatpush1.bf16.msra.mxu0 0
  %156 = vmatprep.subr.bf16.mxu0 0
  %157 = vmatpush1.bf16.msra.mxu0 0
  %158 = vmatprep.subr.bf16.mxu0 0
  %159 = vmatpush1.bf16.msra.mxu0 0
  %160 = vmatprep.subr.bf16.mxu0 0
  %161 = vmatpush1.bf16.msra.mxu0 0
  %162 = vmatprep.subr.bf16.mxu0 0
  %163 = vmatpush1.bf16.msra.mxu0 0
  %164 = vmatprep.mubr.bf16.mxu0 0
  %165 = vmatmul.mubr.bf16.gmra.mrb[0].mxu0 %v130
  %v166 = vpop.f32.mrb[0].mxu0
  %v167 = vadd.f32 %v102, %v166
  %v168 = vpop.f32.mrb[0].mxu0
  %v169 = vpop.f32.mrb[0].mxu0
  %v170 = vpop.f32.mrb[0].mxu0
  %171 = vdwg.mxu0
  %v172 = vmax.f32 %v167, 0.0
  %v173 = vpack.c.bf16 %v172, %v172
  %v174 = vld [vmem:[%s5] sm:$0xf]
  %v175 = vld [vmem:[%s5 + $0x4] sm:$0xf]
  %v176 = vld [vmem:[%s5 + $0x8] sm:$0xf]
  %v177 = vld [vmem:[%s5 + $0xc] sm:$0xf]
  %v178 = vld [vmem:[%s5 + $0x10] sm:$0xf]
  %v179 = vld [vmem:[%s5 + $0x14] sm:$0xf]
  %v180 = vld [vmem:[%s5 + $0x18] sm:$0xf]
  %v181 = vld [vmem:[%s5 + $0x1c] sm:$0xf]
  %v182 = vld [vmem:[%s6] sm:$0x1]
  %v184 = vlaneseq
  %v185 = vshrl.u32 %v184, 7
  %v186 = vsub.s32 0, %v185
  %v187 = vrot.slane %v182, %v186
  %v197 = vunpack.c.l.b16 %v174
  %v198 = vunpack.c.l.b16 %v175
  %v199 = vunpack.c.l.b16 %v176
  %v200 = vunpack.c.l.b16 %v177
  %v201 = vunpack.c.l.b16 %v178
  %v202 = vunpack.c.l.b16 %v179
  %v203 = vunpack.c.l.b16 %v180
  %v204 = vunpack.c.l.b16 %v181
  %v205 = vpack.c.b16 %v198, %v197
  %v206 = vpack.c.b16 %v200, %v199
  %v207 = vpack.c.b16 %v202, %v201
  %v208 = vpack.c.b16 %v204, %v203
  %v214 = vsel %vm128, %v173, 0
  %216 = vmatprep.subr.bf16.mxu0 0
  %217 = vmatpush1.bf16.msra.mxu0 %v205
  %218 = vmatprep.subr.bf16.mxu0 0
  %219 = vmatpush1.bf16.msra.mxu0 %v206
  %220 = vmatprep.subr.bf16.mxu0 0
  %221 = vmatpush1.bf16.msra.mxu0 %v207
  %222 = vmatprep.subr.bf16.mxu0 0
  %223 = vmatpush1.bf16.msra.mxu0 %v208
  %224 = vmatprep.subr.bf16.mxu0 0
  %225 = vmatpush1.bf16.msra.mxu0 0
  %226 = vmatprep.subr.bf16.mxu0 0
  %227 = vmatpush1.bf16.msra.mxu0 0
  %228 = vmatprep.subr.bf16.mxu0 0
  %229 = vmatpush1.bf16.msra.mxu0 0
  %230 = vmatprep.subr.bf16.mxu0 0
  %231 = vmatpush1.bf16.msra.mxu0 0
  %232 = vmatprep.subr.bf16.mxu0 0
  %233 = vmatpush1.bf16.msra.mxu0 0
  %234 = vmatprep.subr.bf16.mxu0 0
  %235 = vmatpush1.bf16.msra.mxu0 0
  %236 = vmatprep.subr.bf16.mxu0 0
  %237 = vmatpush1.bf16.msra.mxu0 0
  %238 = vmatprep.subr.bf16.mxu0 0
  %239 = vmatpush1.bf16.msra.mxu0 0
  %240 = vmatprep.subr.bf16.mxu0 0
  %241 = vmatpush1.bf16.msra.mxu0 0
  %242 = vmatprep.subr.bf16.mxu0 0
  %243 = vmatpush1.bf16.msra.mxu0 0
  %244 = vmatprep.subr.bf16.mxu0 0
  %245 = vmatpush1.bf16.msra.mxu0 0
  %246 = vmatprep.subr.bf16.mxu0 0
  %247 = vmatpush1.bf16.msra.mxu0 0
  %248 = vmatprep.mubr.bf16.mxu0 0
  %249 = vmatmul.mubr.bf16.gmra.mrb[0].mxu0 %v214
  %v250 = vpop.f32.mrb[0].mxu0
  %v251 = vadd.f32 %v187, %v250
  %v252 = vpop.f32.mrb[0].mxu0
  %v253 = vpop.f32.mrb[0].mxu0
  %v254 = vpop.f32.mrb[0].mxu0
  %255 = vdwg.mxu0
  %vm256 = vcmask 31744
  %257 = vst.msk [vmem:[%s7] sm:$0xff] %vm256, %v251
  // Predicated region
  $region30: #{forward_dynamics_network.1} parent=0 // pred_check
    _
  $region31: #{forward_dynamics_network.1} parent=0 // pred_check_branch
    %259 = sbr.rel (0) target = $region33
  $region32: #{forward_dynamics_network.1} parent=0 // pred_region
    _
  $region33: #{forward_dynamics_network.1} parent=0 // pred_fallthru
    _
  // Predicated region
  $region34: #{forward_dynamics_network.1} parent=0 // pred_check
    _
  $region35: #{forward_dynamics_network.1} parent=0 // pred_check_branch
    %261 = sbr.rel (0) target = $region37
  $region36: #{forward_dynamics_network.1} parent=0 // pred_region
    _
  $region37: #{forward_dynamics_network.1} parent=0 // pred_fallthru
    _

</llo_original>
